<compile_context>
chip_gen: v7x
topology: tpu7x:2x2x1
jax: 0.10.0
libtpu: 0.0.40
codegen_flags: <defaults>
</compile_context>

<pallas_src>
import functools

import jax
import jax.numpy as jnp
import numpy as np
from jax.experimental import pallas as pl
from jax.experimental.pallas import tpu as pltpu


def _fm_fwd_kernel(emb_ref, wbd_ref, b_ref, lin_ref, out_ref, *,
                   num_fields, embed_dim):
    """One batch tile of the FM forward pass, batch on the lane axis.

    emb_ref: (F*D, TB)   bf16  raw embeddings, fields*dim on sublanes,
                               batch on lanes
    wbd_ref: (F*D, F*D)  f32   block-diagonal per-field Linear weights
                               (sparse_vec already folded in)
    b_ref  : (F*D, 1)    f32   concatenated per-field biases (column vector)
    lin_ref: (1, TB)     f32   FeaturesLinear term (gathered in the wrapper)
    out_ref: (1, TB)     f32   sigmoid(linear + fm)
    """
    f, d = num_fields, embed_dim

    # bf16 stream -> exact upcast to f32; weights stay f32 for accuracy.
    e = emb_ref[...].astype(jnp.float32)                     # (F*D, TB)
    # t[fo, b] = sum_fi W_bd[fo, fi] * e[fi, b]  -> (F*D, TB), single MXU call.
    t = jnp.dot(wbd_ref[...], e, preferred_element_type=jnp.float32)
    t = t + b_ref[...]                                       # lane-broadcast bias

    tb = t.shape[1]
    s = jnp.zeros((d, tb), jnp.float32)                      # sum_f t_f   (D, TB)
    sq_sum = jnp.zeros((1, tb), jnp.float32)                 # sum_{f,d} t^2 (1, TB)
    for i in range(f):                                       # F is static & tiny
        t_i = t[i * d:(i + 1) * d, :]                        # sublane-aligned slice
        s = s + t_i
        sq_sum = sq_sum + jnp.sum(t_i * t_i, axis=0, keepdims=True)

    fm = 0.5 * (jnp.sum(s * s, axis=0, keepdims=True) - sq_sum)   # (1, TB)
    out_ref[...] = jax.nn.sigmoid(lin_ref[...] + fm)


def fm_forward(x_idx, params, *, tile_b=1024, min_tiles=1):
    """Full forward. x_idx: (B, F) int32 per-field indices.

    Returns (sigmoid(linear + fm), shape (B,)) and dist (shape (1,), zeros
    because alpha is None).

    tile_b: batch tile (multiple of 128); 1024 amortizes the ~0.35us per-step
            overhead while staying far under every generation's VMEM limit.
    min_tiles: set to 4 on v7x (2 TensorCores share the "parallel" grid, and
            each core needs >= 2 steps to overlap DMA with compute); leave 1
            on single-TC v5e/v6e so small batches are not padded needlessly.
    """
    assert tile_b % 128 == 0, "tile_b must be a multiple of 128 (lane axis)"
    offsets = params["offsets"]                       # (F,) int32
    B, F = x_idx.shape
    D = params["embed_table"].shape[-1]
    FD = F * D

    num_tiles = max(min_tiles, pl.cdiv(B, tile_b))
    bp = num_tiles * tile_b

    # --- plain-JAX glue: data-dependent gathers ------------------------------
    # Pad the *indices* (pad rows gather row 0 for free) and gather straight
    # from a pre-cast bf16 table: no separate astype / pad passes over the
    # (B, F*D) intermediate.
    idx = x_idx + offsets[None, :]                                 # (B, F)
    idx_p = jnp.pad(idx, ((0, bp - B), (0, 0)))                    # (bp, F)
    table_bf16 = params["embed_table"].astype(jnp.bfloat16)        # (total, D)
    gathered = table_bf16[idx_p]                                   # (bp, F, D) bf16
    # (F*D, B) layout: batch on lanes, MXU-native (K, N) orientation.
    emb_t = jnp.transpose(gathered, (1, 2, 0)).reshape(FD, bp)     # (F*D, bp)
    # TODO(synk): for production vocabularies that fit VMEM on 128 MiB parts,
    # move this gather in-kernel (scalar-prefetched indices + resident table)
    # to kill the materialized (B, F*D) HBM intermediate entirely.

    lin_p = (jnp.sum(params["fc_weight"][idx_p], axis=(1, 2))
             + params["lin_bias"][0])[None, :].astype(jnp.float32)  # (1, bp)

    # Fold sparse_vec into the per-field Linear weights:
    #   (e * sv_f) @ W_f.T == e @ (W_f * sv_f[None, :]).T
    sv = jax.nn.sigmoid(params["sparse_var"] * 15.0)               # (F, D)
    w_eff = params["W"] * sv[:, None, :]                           # (F, Do, Di)
    # Block-diagonal (F*D, F*D) so all F per-field matmuls fuse into one.
    w_bd = jnp.zeros((FD, FD), jnp.float32)
    for f in range(F):
        w_bd = w_bd.at[f * D:(f + 1) * D, f * D:(f + 1) * D].set(w_eff[f])
    b_col = params["b"].reshape(FD, 1).astype(jnp.float32)

    kernel = functools.partial(_fm_fwd_kernel, num_fields=F, embed_dim=D)
    out = pl.pallas_call(
        kernel,
        out_shape=jax.ShapeDtypeStruct((1, bp), jnp.float32),
        grid_spec=pltpu.PrefetchScalarGridSpec(
            num_scalar_prefetch=0,
            grid=(num_tiles,),
            in_specs=[
                pl.BlockSpec((FD, tile_b), lambda i: (0, i)),   # embeddings (K, N)
                # Grid-invariant operands (tiny at D=16).
                pl.BlockSpec((FD, FD), lambda i: (0, 0)),       # W block-diag, f32
                pl.BlockSpec((FD, 1), lambda i: (0, 0)),        # bias column, f32
                pl.BlockSpec((1, tile_b), lambda i: (0, i)),    # linear term
            ],
            out_specs=pl.BlockSpec((1, tile_b), lambda i: (0, i)),
        ),
        compiler_params=pltpu.CompilerParams(
            dimension_semantics=("parallel",)),
    )(emb_t, w_bd, b_col, lin_p)

    dist = jnp.zeros((1,), jnp.float32)            # alpha is None
    return out[0, :B], dist


def fm_forward_ref(x_idx, params):
    """Pure-JAX f32 reference mirroring the PyTorch module (training path)."""
    offsets = params["offsets"]
    idx = x_idx + offsets[None, :]
    emb = params["embed_table"][idx]                               # (B, F, D)
    sv = jax.nn.sigmoid(params["sparse_var"] * 15.0)
    e = emb * sv[None, :, :]
    t = jnp.einsum("bfd,fod->bfo", e, params["W"]) + params["b"][None, :, :]
    s = jnp.sum(t, axis=1)
    sq = jnp.sum(t * t, axis=1)
    fm = 0.5 * jnp.sum(s * s - sq, axis=-1, keepdims=True)
    lin = jnp.sum(params["fc_weight"][idx], axis=1) + params["lin_bias"]
    return jax.nn.sigmoid((lin + fm)[:, 0])


if __name__ == "__main__":
    # Small synthetic config: 3 fields, embed_dim=16, batch=300 (exercises the
    # pad-to-tile remainder path: 300 -> 1 tile of 1024).
    field_dims = [10, 20, 30]
    F = len(field_dims)
    D = 16
    B = 300
    total = sum(field_dims)

    key = jax.random.PRNGKey(0)
    k_emb, k_fc, k_w, k_b, k_x = jax.random.split(key, 5)

    params = {
        "offsets": jnp.asarray(np.concatenate([[0], np.cumsum(field_dims)[:-1]]),
                               dtype=jnp.int32),
        # FeaturesEmbedding: Embedding(sum(field_dims), embed_dim)
        "embed_table": jax.random.uniform(k_emb, (total, D), jnp.float32,
                                          minval=-0.1, maxval=0.1),
        # FeaturesLinear: Embedding(sum(field_dims), 1) + scalar bias
        "fc_weight": jax.random.normal(k_fc, (total, 1), jnp.float32) * 0.05,
        "lin_bias": jnp.zeros((1,), jnp.float32),
        # per-field nn.Linear(embed_dim, embed_dim): stacked weights / biases
        "W": jax.random.normal(k_w, (F, D, D), jnp.float32) / np.sqrt(D),
        "b": jax.random.normal(k_b, (F, D), jnp.float32) * 0.01,
        # sparse_var init to ones per the module __init__
        "sparse_var": jnp.ones((F, D), jnp.float32),
    }
    # TODO(synk): pruned / sim_prune / polar_prune / cal_sim_groups /
    # similar_embedding_indices and the alpha-distance branch are host-side,
    # data-dependent model restructuring; only the default training forward
    # path (pruned=False, alpha=None) is implemented in the kernel.

    # Deterministic valid indices per field.
    keys = jax.random.split(k_x, F)
    x_idx = jnp.stack(
        [jax.random.randint(keys[i], (B,), 0, field_dims[i], dtype=jnp.int32)
         for i in range(F)], axis=1)

    out, dist = fm_forward(x_idx, params)
    out = jax.block_until_ready(out)
    dist = jax.block_until_ready(dist)

    ref = jax.block_until_ready(fm_forward_ref(x_idx, params))
    # Only the embedding stream is bf16 (weights stay f32) -> tight tolerance.
    np.testing.assert_allclose(np.asarray(out), np.asarray(ref),
                               rtol=1e-2, atol=1e-2)
    assert out.shape == (B,) and dist.shape == (1,)
    print("KERNEL_OK")
</pallas_src>

<mosaic_0001>
module attributes {stable_mosaic.version = 11 : i64} {
  func.func @_fm_fwd_kernel(%arg0: i32, %arg1: memref<48x1024xbf16, #tpu.memory_space<vmem>>, %arg2: memref<48x48xf32, #tpu.memory_space<vmem>>, %arg3: memref<48x1xf32, #tpu.memory_space<vmem>>, %arg4: memref<1x1024xf32, #tpu.memory_space<vmem>>, %arg5: memref<1x1024xf32, #tpu.memory_space<vmem>>) attributes {dimension_semantics = [#tpu.dimension_semantics<parallel>], iteration_bounds = array<i64: 1>, scalar_prefetch = 0 : i64, scratch_operands = 0 : i64, tpu.core_type = #tpu.core_type<tc>, window_params = [{transform_indices = @transform_0, window_bounds = array<i64: 48, 1024>}, {pipeline_mode = #tpu.pipeline_mode<synchronous>, transform_indices = @transform_1, window_bounds = array<i64: 48, 48>}, {pipeline_mode = #tpu.pipeline_mode<synchronous>, transform_indices = @transform_2, window_bounds = array<i64: 48, 1>}, {transform_indices = @transform_3, window_bounds = array<i64: 1, 1024>}, {transform_indices = @transform_4, window_bounds = array<i64: 1, 1024>}]} {
    %c0 = arith.constant 0 : index
    %c0_0 = arith.constant 0 : index
    %0 = vector.load %arg1[%c0, %c0_0] : memref<48x1024xbf16, #tpu.memory_space<vmem>>, vector<48x1024xbf16>
    %1 = arith.extf %0 : vector<48x1024xbf16> to vector<48x1024xf32>
    %c0_1 = arith.constant 0 : index
    %c0_2 = arith.constant 0 : index
    %2 = vector.load %arg2[%c0_1, %c0_2] : memref<48x48xf32, #tpu.memory_space<vmem>>, vector<48x48xf32>
    %cst = arith.constant dense<0.000000e+00> : vector<48x1024xf32>
    %3 = tpu.matmul %2, %1, %cst {dimension_numbers = #tpu.dot_dimension_numbers<[1], [0], [0], [1], [0, 0, 1, 1], [], []>} : vector<48x48xf32>, vector<48x1024xf32>, vector<48x1024xf32> -> vector<48x1024xf32>
    %c0_3 = arith.constant 0 : index
    %c0_4 = arith.constant 0 : index
    %4 = vector.load %arg3[%c0_3, %c0_4] : memref<48x1xf32, #tpu.memory_space<vmem>>, vector<48x1xf32>
    %5 = vector.broadcast %4 : vector<48x1xf32> to vector<48x1024xf32>
    %6 = arith.addf %3, %5 : vector<48x1024xf32>
    %cst_5 = arith.constant 0.000000e+00 : f32
    %7 = vector.broadcast %cst_5 : f32 to vector<16x1024xf32>
    %cst_6 = arith.constant 0.000000e+00 : f32
    %8 = vector.broadcast %cst_6 : f32 to vector<1x1024xf32>
    %9 = vector.extract_strided_slice %6 {offsets = [0, 0], sizes = [16, 1024], strides = [1, 1]} : vector<48x1024xf32> to vector<16x1024xf32>
    %10 = arith.addf %7, %9 : vector<16x1024xf32>
    %11 = arith.mulf %9, %9 : vector<16x1024xf32>
    %cst_7 = arith.constant dense<0.000000e+00> : vector<1024xf32>
    %12 = vector.multi_reduction <add>, %11, %cst_7 [0] : vector<16x1024xf32> to vector<1024xf32>
    %13 = vector.shape_cast %12 : vector<1024xf32> to vector<1x1024xf32>
    %14 = arith.addf %8, %13 : vector<1x1024xf32>
    %15 = vector.extract_strided_slice %6 {offsets = [16, 0], sizes = [16, 1024], strides = [1, 1]} : vector<48x1024xf32> to vector<16x1024xf32>
    %16 = arith.addf %10, %15 : vector<16x1024xf32>
    %17 = arith.mulf %15, %15 : vector<16x1024xf32>
    %cst_8 = arith.constant dense<0.000000e+00> : vector<1024xf32>
    %18 = vector.multi_reduction <add>, %17, %cst_8 [0] : vector<16x1024xf32> to vector<1024xf32>
    %19 = vector.shape_cast %18 : vector<1024xf32> to vector<1x1024xf32>
    %20 = arith.addf %14, %19 : vector<1x1024xf32>
    %21 = vector.extract_strided_slice %6 {offsets = [32, 0], sizes = [16, 1024], strides = [1, 1]} : vector<48x1024xf32> to vector<16x1024xf32>
    %22 = arith.addf %16, %21 : vector<16x1024xf32>
    %23 = arith.mulf %21, %21 : vector<16x1024xf32>
    %cst_9 = arith.constant dense<0.000000e+00> : vector<1024xf32>
    %24 = vector.multi_reduction <add>, %23, %cst_9 [0] : vector<16x1024xf32> to vector<1024xf32>
    %25 = vector.shape_cast %24 : vector<1024xf32> to vector<1x1024xf32>
    %26 = arith.addf %20, %25 : vector<1x1024xf32>
    %27 = arith.mulf %22, %22 : vector<16x1024xf32>
    %cst_10 = arith.constant dense<0.000000e+00> : vector<1024xf32>
    %28 = vector.multi_reduction <add>, %27, %cst_10 [0] : vector<16x1024xf32> to vector<1024xf32>
    %29 = vector.shape_cast %28 : vector<1024xf32> to vector<1x1024xf32>
    %30 = arith.subf %29, %26 : vector<1x1024xf32>
    %cst_11 = arith.constant 5.000000e-01 : f32
    %31 = vector.broadcast %cst_11 : f32 to vector<1x1024xf32>
    %32 = arith.mulf %31, %30 : vector<1x1024xf32>
    %c0_12 = arith.constant 0 : index
    %c0_13 = arith.constant 0 : index
    %33 = vector.load %arg4[%c0_12, %c0_13] : memref<1x1024xf32, #tpu.memory_space<vmem>>, vector<1x1024xf32>
    %34 = arith.addf %33, %32 : vector<1x1024xf32>
    %35 = arith.negf %34 : vector<1x1024xf32>
    %36 = math.exp %35 : vector<1x1024xf32>
    %cst_14 = arith.constant 1.000000e+00 : f32
    %37 = vector.broadcast %cst_14 : f32 to vector<1x1024xf32>
    %38 = arith.addf %37, %36 : vector<1x1024xf32>
    %39 = arith.divf %37, %38 : vector<1x1024xf32>
    %c0_15 = arith.constant 0 : index
    %c0_16 = arith.constant 0 : index
    %40 = vector.load %arg5[%c0_15, %c0_16] : memref<1x1024xf32, #tpu.memory_space<vmem>>, vector<1x1024xf32>
    tpu.vector_store %arg5[%c0_15, %c0_16], %39 {strides = array<i32>} : memref<1x1024xf32, #tpu.memory_space<vmem>>, vector<1x1024xf32>,
    return
  }
  func.func @transform_0(%arg0: i32) -> (i32, i32) {
    %c0_i32 = arith.constant 0 : i32
    %c0_i32_0 = arith.constant 0 : i32
    return %c0_i32, %arg0 : i32, i32
  }
  func.func @transform_1(%arg0: i32) -> (i32, i32) {
    %c0_i32 = arith.constant 0 : i32
    %c0_i32_0 = arith.constant 0 : i32
    %c0_i32_1 = arith.constant 0 : i32
    return %c0_i32, %c0_i32_0 : i32, i32
  }
  func.func @transform_2(%arg0: i32) -> (i32, i32) {
    %c0_i32 = arith.constant 0 : i32
    %c0_i32_0 = arith.constant 0 : i32
    %c0_i32_1 = arith.constant 0 : i32
    return %c0_i32, %c0_i32_0 : i32, i32
  }
  func.func @transform_3(%arg0: i32) -> (i32, i32) {
    %c0_i32 = arith.constant 0 : i32
    %c0_i32_0 = arith.constant 0 : i32
    return %c0_i32, %arg0 : i32, i32
  }
  func.func @transform_4(%arg0: i32) -> (i32, i32) {
    %c0_i32 = arith.constant 0 : i32
    %c0_i32_0 = arith.constant 0 : i32
    return %c0_i32, %arg0 : i32, i32
  }
}

</mosaic_0001>

<llo_original>
// kernel: tpu_custom_call.1
$region0: #{tpu_custom_call.1}
  #allocation0 [shape = 'u32[]', space=smem, size = 0x4, offset = 0x4, fixed_abs, tag = 'smem constant byte address 0x4 - core index']
  #allocation1 [shape = 'u32[144,128]{1,0:T(1,128)}', space=vmem, size = 0x12000, scoped, tag = 'internal scratch']
  %s0 = inlined_call_operand.hbm [shape: bf16[48,1024], index: 0, kind: input, shape index: {}]
  %s1 = inlined_call_operand.vmem [shape: f32[48,48], index: 1, kind: input, shape index: {}]
  %s2 = inlined_call_operand.vmem [shape: f32[48,1], index: 2, kind: input, shape index: {}]
  %s3 = inlined_call_operand.vmem [shape: f32[1,1024], index: 3, kind: input, shape index: {}]
  %s4 = inlined_call_operand.hbm [shape: f32[1,1024], index: 4, kind: output, shape index: {}]
  %s5 = sld [smem:[#allocation0]]
  $region30: #{tpu_custom_call.1} parent=0
    _
  %s7 = ssub.s32 1, %s5
  %s8 = scalar_select 0, %s7, %s5
  $region1: #{tpu_custom_call.1} parent=0
    #allocation2 [shape = 'u8[98304]{0}', space=vmem, size = 0x18000, scoped, tag = 'input window, operand 0, single buffered']
    #allocation3 [shape = 's32[1]{0}', space=sflag, size = 0x4, scoped, tag = 'scoped memory for tpu_custom_call.1']
    #allocation4 [shape = 's32[1]{0}', space=sflag, size = 0x4, scoped, tag = 'scoped memory for tpu_custom_call.1']
    #allocation5 [shape = 'u8[4096]{0}', space=vmem, size = 0x1000, scoped, tag = 'output window, operand 0, single buffered']
    %9 = vsyncpa [#allocation3], 0
    %10 = vsyncpa [#allocation4], 0
    // Predicated region
    $region2: #{tpu_custom_call.1} parent=1 // pred_check
      _
    $region3: #{tpu_custom_call.1} parent=1 // pred_check_branch
      %12 = sbr.rel (0) target = $region5
    $region4: #{tpu_custom_call.1} parent=1 // pred_region
      %s14 = ssub.s32 3072, 3072
      %15 = vsyncadd [#allocation3], %s14
      %s16 = sshll.u32 [#allocation2], 4
      %s17 = int_to_ptr.vmem [resolvable:$true] %s16
      %22 = dma.hbm_to_vmem [thread:$0]  %s0, 3072, %s17, [#allocation3], 512, 512, 32
    $region5: #{tpu_custom_call.1} parent=1 // pred_fallthru
      _
    // Predicated region
    $region6: #{tpu_custom_call.1} parent=1 // pred_check
      _
    $region7: #{tpu_custom_call.1} parent=1 // pred_check_branch
      %24 = sbr.rel (0) target = $region9
    $region8: #{tpu_custom_call.1} parent=1 // pred_region
      _
    $region9: #{tpu_custom_call.1} parent=1 // pred_fallthru
      _
    // Predicated region
    $region10: #{tpu_custom_call.1} parent=1 // pred_check
      _
    $region11: #{tpu_custom_call.1} parent=1 // pred_check_branch
      %26 = sbr.rel (0) target = $region13
    $region12: #{tpu_custom_call.1} parent=1 // pred_region
      _
    $region13: #{tpu_custom_call.1} parent=1 // pred_fallthru
      _
    // Predicated region
    $region14: #{tpu_custom_call.1} parent=1 // pred_check
      _
    $region15: #{tpu_custom_call.1} parent=1 // pred_check_branch
      %28 = sbr.rel (0) target = $region17
    $region16: #{tpu_custom_call.1} parent=1 // pred_region
      _
    $region17: #{tpu_custom_call.1} parent=1 // pred_fallthru
      _
    // Predicated region
    $region18: #{tpu_custom_call.1} parent=1 // pred_check
      _
    $region19: #{tpu_custom_call.1} parent=1 // pred_check_branch
      %30 = sbr.rel (0) target = $region21
    $region20: #{tpu_custom_call.1} parent=1 // pred_region
      %31 = dma.done [#allocation3], 3072
    $region21: #{tpu_custom_call.1} parent=1 // pred_fallthru
      _
    %v32 = vld [vmem:[#allocation2] sm:$0xff]
    %v33 = vld [vmem:[#allocation2 + $0x8] sm:$0xff]
    %v34 = vld [vmem:[#allocation2 + $0x10] sm:$0xff]
    %v35 = vld [vmem:[#allocation2 + $0x18] sm:$0xff]
    %v36 = vld [vmem:[#allocation2 + $0x20] sm:$0xff]
    %v37 = vld [vmem:[#allocation2 + $0x28] sm:$0xff]
    %v38 = vld [vmem:[#allocation2 + $0x30] sm:$0xff]
    %v39 = vld [vmem:[#allocation2 + $0x38] sm:$0xff]
    %v40 = vld [vmem:[#allocation2 + $0x40] sm:$0xff]
    %v41 = vld [vmem:[#allocation2 + $0x48] sm:$0xff]
    %v42 = vld [vmem:[#allocation2 + $0x50] sm:$0xff]
    %v43 = vld [vmem:[#allocation2 + $0x58] sm:$0xff]
    %v44 = vld [vmem:[#allocation2 + $0x60] sm:$0xff]
    %v45 = vld [vmem:[#allocation2 + $0x68] sm:$0xff]
    %v46 = vld [vmem:[#allocation2 + $0x70] sm:$0xff]
    %v47 = vld [vmem:[#allocation2 + $0x78] sm:$0xff]
    %v48 = vld [vmem:[#allocation2 + $0x80] sm:$0xff]
    %v49 = vld [vmem:[#allocation2 + $0x88] sm:$0xff]
    %v50 = vld [vmem:[#allocation2 + $0x90] sm:$0xff]
    %v51 = vld [vmem:[#allocation2 + $0x98] sm:$0xff]
    %v52 = vld [vmem:[#allocation2 + $0xa0] sm:$0xff]
    %v53 = vld [vmem:[#allocation2 + $0xa8] sm:$0xff]
    %v54 = vld [vmem:[#allocation2 + $0xb0] sm:$0xff]
    %v55 = vld [vmem:[#allocation2 + $0xb8] sm:$0xff]
    %v56 = vunpack.c.l.bf16 %v32
    %v57 = vunpack.c.h.bf16 %v32
    %v58 = vunpack.c.l.bf16 %v33
    %v59 = vunpack.c.h.bf16 %v33
    %v60 = vunpack.c.l.bf16 %v34
    %v61 = vunpack.c.h.bf16 %v34
    %v62 = vunpack.c.l.bf16 %v35
    %v63 = vunpack.c.h.bf16 %v35
    %v64 = vunpack.c.l.bf16 %v36
    %v65 = vunpack.c.h.bf16 %v36
    %v66 = vunpack.c.l.bf16 %v37
    %v67 = vunpack.c.h.bf16 %v37
    %v68 = vunpack.c.l.bf16 %v38
    %v69 = vunpack.c.h.bf16 %v38
    %v70 = vunpack.c.l.bf16 %v39
    %v71 = vunpack.c.h.bf16 %v39
    %v72 = vunpack.c.l.bf16 %v40
    %v73 = vunpack.c.h.bf16 %v40
    %v74 = vunpack.c.l.bf16 %v41
    %v75 = vunpack.c.h.bf16 %v41
    %v76 = vunpack.c.l.bf16 %v42
    %v77 = vunpack.c.h.bf16 %v42
    %v78 = vunpack.c.l.bf16 %v43
    %v79 = vunpack.c.h.bf16 %v43
    %v80 = vunpack.c.l.bf16 %v44
    %v81 = vunpack.c.h.bf16 %v44
    %v82 = vunpack.c.l.bf16 %v45
    %v83 = vunpack.c.h.bf16 %v45
    %v84 = vunpack.c.l.bf16 %v46
    %v85 = vunpack.c.h.bf16 %v46
    %v86 = vunpack.c.l.bf16 %v47
    %v87 = vunpack.c.h.bf16 %v47
    %v88 = vunpack.c.l.bf16 %v48
    %v89 = vunpack.c.h.bf16 %v48
    %v90 = vunpack.c.l.bf16 %v49
    %v91 = vunpack.c.h.bf16 %v49
    %v92 = vunpack.c.l.bf16 %v50
    %v93 = vunpack.c.h.bf16 %v50
    %v94 = vunpack.c.l.bf16 %v51
    %v95 = vunpack.c.h.bf16 %v51
    %v96 = vunpack.c.l.bf16 %v52
    %v97 = vunpack.c.h.bf16 %v52
    %v98 = vunpack.c.l.bf16 %v53
    %v99 = vunpack.c.h.bf16 %v53
    %v100 = vunpack.c.l.bf16 %v54
    %v101 = vunpack.c.h.bf16 %v54
    %v102 = vunpack.c.l.bf16 %v55
    %v103 = vunpack.c.h.bf16 %v55
    %v104 = vld [vmem:[%s1] sm:$0xff]
    %v105 = vld [vmem:[%s1 + $0x8] sm:$0xff]
    %v106 = vld [vmem:[%s1 + $0x10] sm:$0xff]
    %v107 = vld [vmem:[%s1 + $0x18] sm:$0xff]
    %v108 = vld [vmem:[%s1 + $0x20] sm:$0xff]
    %v109 = vld [vmem:[%s1 + $0x28] sm:$0xff]
    %v110 = vld [vmem:[%s2] sm:$0xff]
    %v111 = vld [vmem:[%s2 + $0x8] sm:$0xff]
    %v112 = vld [vmem:[%s2 + $0x10] sm:$0xff]
    %v113 = vld [vmem:[%s2 + $0x18] sm:$0xff]
    %v114 = vld [vmem:[%s2 + $0x20] sm:$0xff]
    %v115 = vld [vmem:[%s2 + $0x28] sm:$0xff]
    %117 = vset.pattern.permute.xlu0 0
    %118 = vperm.xlu0 %117, %v110
    %v119 = vpop.permute.xlu0 %118
    %122 = vset.pattern.permute.xlu0 0
    %123 = vperm.xlu0 %122, %v111
    %v124 = vpop.permute.xlu0 %123
    %127 = vset.pattern.permute.xlu0 0
    %128 = vperm.xlu0 %127, %v112
    %v129 = vpop.permute.xlu0 %128
    %132 = vset.pattern.permute.xlu0 0
    %133 = vperm.xlu0 %132, %v113
    %v134 = vpop.permute.xlu0 %133
    %137 = vset.pattern.permute.xlu0 0
    %138 = vperm.xlu0 %137, %v114
    %v139 = vpop.permute.xlu0 %138
    %142 = vset.pattern.permute.xlu0 0
    %143 = vperm.xlu0 %142, %v115
    %v144 = vpop.permute.xlu0 %143
    %vm146 = vcmask 392192
    %v148 = vsel %vm146, %v104, 0
    %v151 = vsel %vm146, %v105, 0
    %v154 = vsel %vm146, %v106, 0
    %v157 = vsel %vm146, %v107, 0
    %v160 = vsel %vm146, %v108, 0
    %v163 = vsel %vm146, %v109, 0
    %165 = vmatprep.subr.mxu0 %v57
    %166 = vmatpush1.msra.mxu0 %v56
    %167 = vmatprep.subr.mxu0 %v65
    %168 = vmatpush1.msra.mxu0 %v64
    %169 = vmatprep.subr.mxu0 %v73
    %170 = vmatpush1.msra.mxu0 %v72
    %171 = vmatprep.subr.mxu0 %v81
    %172 = vmatpush1.msra.mxu0 %v80
    %173 = vmatprep.subr.mxu0 %v89
    %174 = vmatpush1.msra.mxu0 %v88
    %175 = vmatprep.subr.mxu0 %v97
    %176 = vmatpush1.msra.mxu0 %v96
    %177 = vmatprep.subr.mxu0 0.0
    %178 = vmatpush1.msra.mxu0 0.0
    %179 = vmatprep.subr.mxu0 0.0
    %180 = vmatpush1.msra.mxu0 0.0
    %181 = vmatprep.subr.mxu0 0.0
    %182 = vmatpush1.msra.mxu0 0.0
    %183 = vmatprep.subr.mxu0 0.0
    %184 = vmatpush1.msra.mxu0 0.0
    %185 = vmatprep.subr.mxu0 0.0
    %186 = vmatpush1.msra.mxu0 0.0
    %187 = vmatprep.subr.mxu0 0.0
    %188 = vmatpush1.msra.mxu0 0.0
    %189 = vmatprep.subr.mxu0 0.0
    %190 = vmatpush1.msra.mxu0 0.0
    %191 = vmatprep.subr.mxu0 0.0
    %192 = vmatpush1.msra.mxu0 0.0
    %193 = vmatprep.subr.mxu0 0.0
    %194 = vmatpush1.msra.mxu0 0.0
    %195 = vmatprep.subr.mxu0 0.0
    %196 = vmatpush1.msra.mxu0 0.0
    %197 = vmatprep.subr.mxu0 0.0
    %198 = vmatpush1.msra.mxu0 0.0
    %199 = vmatprep.subr.mxu0 0.0
    %200 = vmatpush1.msra.mxu0 0.0
    %201 = vmatprep.subr.mxu0 0.0
    %202 = vmatpush1.msra.mxu0 0.0
    %203 = vmatprep.subr.mxu0 0.0
    %204 = vmatpush1.msra.mxu0 0.0
    %205 = vmatprep.subr.mxu0 0.0
    %206 = vmatpush1.msra.mxu0 0.0
    %207 = vmatprep.subr.mxu0 0.0
    %208 = vmatpush1.msra.mxu0 0.0
    %209 = vmatprep.subr.mxu0 0.0
    %210 = vmatpush1.msra.mxu0 0.0
    %211 = vmatprep.subr.mxu0 0.0
    %212 = vmatpush1.msra.mxu0 0.0
    %213 = vmatprep.subr.mxu0 0.0
    %214 = vmatpush1.msra.mxu0 0.0
    %215 = vmatprep.subr.mxu0 0.0
    %216 = vmatpush1.msra.mxu0 0.0
    %217 = vmatprep.subr.mxu0 0.0
    %218 = vmatpush1.msra.mxu0 0.0
    %219 = vmatprep.subr.mxu0 0.0
    %220 = vmatpush1.msra.mxu0 0.0
    %221 = vmatprep.subr.mxu0 0.0
    %222 = vmatpush1.msra.mxu0 0.0
    %223 = vmatprep.subr.mxu0 0.0
    %224 = vmatpush1.msra.mxu0 0.0
    %225 = vmatprep.subr.mxu0 0.0
    %226 = vmatpush1.msra.mxu0 0.0
    %227 = vmatprep.subr.mxu0 0.0
    %228 = vmatpush1.msra.mxu0 0.0
    %229 = vmatprep.mubr.f32.mxu0 0.0
    %230 = vmatmul.mubr.f32.gmra.mrb[0].mxu0 %v148
    %v231 = vpop.f32.mrb[0].mxu0
    %v232 = vadd.f32 %v119, %v231
    %v233 = vpop.f32.mrb[0].mxu0
    %v234 = vadd.f32 %v119, %v233
    %235 = vmatprep.mubr.f32.mxu0 0.0
    %236 = vmatmul.mubr.f32.gmra.mrb[0].mxu0 %v151
    %v237 = vpop.f32.mrb[0].mxu0
    %v238 = vadd.f32 %v124, %v237
    %v239 = vpop.f32.mrb[0].mxu0
    %v240 = vadd.f32 %v124, %v239
    %241 = vmatprep.mubr.f32.mxu0 0.0
    %242 = vmatmul.mubr.f32.gmra.mrb[0].mxu0 %v154
    %v243 = vpop.f32.mrb[0].mxu0
    %v244 = vadd.f32 %v129, %v243
    %v245 = vpop.f32.mrb[0].mxu0
    %v246 = vadd.f32 %v129, %v245
    %247 = vmatprep.mubr.f32.mxu0 0.0
    %248 = vmatmul.mubr.f32.gmra.mrb[0].mxu0 %v157
    %v249 = vpop.f32.mrb[0].mxu0
    %v250 = vadd.f32 %v134, %v249
    %v251 = vpop.f32.mrb[0].mxu0
    %v252 = vadd.f32 %v134, %v251
    %253 = vmatprep.mubr.f32.mxu0 0.0
    %254 = vmatmul.mubr.f32.gmra.mrb[0].mxu0 %v160
    %v255 = vpop.f32.mrb[0].mxu0
    %v256 = vadd.f32 %v139, %v255
    %v257 = vpop.f32.mrb[0].mxu0
    %v258 = vadd.f32 %v139, %v257
    %259 = vmatprep.mubr.f32.mxu0 0.0
    %260 = vmatmul.mubr.f32.gmra.mrb[0].mxu0 %v163
    %v261 = vpop.f32.mrb[0].mxu0
    %v262 = vadd.f32 %v144, %v261
    %v263 = vpop.f32.mrb[0].mxu0
    %v264 = vadd.f32 %v144, %v263
    %265 = vdwg.mxu0
    %266 = vmatprep.subr.mxu0 %v59
    %267 = vmatpush1.msra.mxu0 %v58
    %268 = vmatprep.subr.mxu0 %v67
    %269 = vmatpush1.msra.mxu0 %v66
    %270 = vmatprep.subr.mxu0 %v75
    %271 = vmatpush1.msra.mxu0 %v74
    %272 = vmatprep.subr.mxu0 %v83
    %273 = vmatpush1.msra.mxu0 %v82
    %274 = vmatprep.subr.mxu0 %v91
    %275 = vmatpush1.msra.mxu0 %v90
    %276 = vmatprep.subr.mxu0 %v99
    %277 = vmatpush1.msra.mxu0 %v98
    %278 = vmatprep.subr.mxu0 0.0
    %279 = vmatpush1.msra.mxu0 0.0
    %280 = vmatprep.subr.mxu0 0.0
    %281 = vmatpush1.msra.mxu0 0.0
    %282 = vmatprep.subr.mxu0 0.0
    %283 = vmatpush1.msra.mxu0 0.0
    %284 = vmatprep.subr.mxu0 0.0
    %285 = vmatpush1.msra.mxu0 0.0
    %286 = vmatprep.subr.mxu0 0.0
    %287 = vmatpush1.msra.mxu0 0.0
    %288 = vmatprep.subr.mxu0 0.0
    %289 = vmatpush1.msra.mxu0 0.0
    %290 = vmatprep.subr.mxu0 0.0
    %291 = vmatpush1.msra.mxu0 0.0
    %292 = vmatprep.subr.mxu0 0.0
    %293 = vmatpush1.msra.mxu0 0.0
    %294 = vmatprep.subr.mxu0 0.0
    %295 = vmatpush1.msra.mxu0 0.0
    %296 = vmatprep.subr.mxu0 0.0
    %297 = vmatpush1.msra.mxu0 0.0
    %298 = vmatprep.subr.mxu0 0.0
    %299 = vmatpush1.msra.mxu0 0.0
    %300 = vmatprep.subr.mxu0 0.0
    %301 = vmatpush1.msra.mxu0 0.0
    %302 = vmatprep.subr.mxu0 0.0
    %303 = vmatpush1.msra.mxu0 0.0
    %304 = vmatprep.subr.mxu0 0.0
    %305 = vmatpush1.msra.mxu0 0.0
    %306 = vmatprep.subr.mxu0 0.0
    %307 = vmatpush1.msra.mxu0 0.0
    %308 = vmatprep.subr.mxu0 0.0
    %309 = vmatpush1.msra.mxu0 0.0
    %310 = vmatprep.subr.mxu0 0.0
    %311 = vmatpush1.msra.mxu0 0.0
    %312 = vmatprep.subr.mxu0 0.0
    %313 = vmatpush1.msra.mxu0 0.0
    %314 = vmatprep.subr.mxu0 0.0
    %315 = vmatpush1.msra.mxu0 0.0
    %316 = vmatprep.subr.mxu0 0.0
    %317 = vmatpush1.msra.mxu0 0.0
    %318 = vmatprep.subr.mxu0 0.0
    %319 = vmatpush1.msra.mxu0 0.0
    %320 = vmatprep.subr.mxu0 0.0
    %321 = vmatpush1.msra.mxu0 0.0
    %322 = vmatprep.subr.mxu0 0.0
    %323 = vmatpush1.msra.mxu0 0.0
    %324 = vmatprep.subr.mxu0 0.0
    %325 = vmatpush1.msra.mxu0 0.0
    %326 = vmatprep.subr.mxu0 0.0
    %327 = vmatpush1.msra.mxu0 0.0
    %328 = vmatprep.subr.mxu0 0.0
    %329 = vmatpush1.msra.mxu0 0.0
    %330 = vmatprep.mubr.f32.mxu0 0.0
    %331 = vmatmul.mubr.f32.gmra.mrb[0].mxu0 %v148
    %v332 = vpop.f32.mrb[0].mxu0
    %v333 = vadd.f32 %v119, %v332
    %v334 = vpop.f32.mrb[0].mxu0
    %v335 = vadd.f32 %v119, %v334
    %336 = vmatprep.mubr.f32.mxu0 0.0
    %337 = vmatmul.mubr.f32.gmra.mrb[0].mxu0 %v151
    %v338 = vpop.f32.mrb[0].mxu0
    %v339 = vadd.f32 %v124, %v338
    %v340 = vpop.f32.mrb[0].mxu0
    %v341 = vadd.f32 %v124, %v340
    %342 = vmatprep.mubr.f32.mxu0 0.0
    %343 = vmatmul.mubr.f32.gmra.mrb[0].mxu0 %v154
    %v344 = vpop.f32.mrb[0].mxu0
    %v345 = vadd.f32 %v129, %v344
    %v346 = vpop.f32.mrb[0].mxu0
    %v347 = vadd.f32 %v129, %v346
    %348 = vmatprep.mubr.f32.mxu0 0.0
    %349 = vmatmul.mubr.f32.gmra.mrb[0].mxu0 %v157
    %v350 = vpop.f32.mrb[0].mxu0
    %v351 = vadd.f32 %v134, %v350
    %v352 = vpop.f32.mrb[0].mxu0
    %v353 = vadd.f32 %v134, %v352
    %354 = vmatprep.mubr.f32.mxu0 0.0
    %355 = vmatmul.mubr.f32.gmra.mrb[0].mxu0 %v160
    %v356 = vpop.f32.mrb[0].mxu0
    %v357 = vadd.f32 %v139, %v356
    %v358 = vpop.f32.mrb[0].mxu0
    %v359 = vadd.f32 %v139, %v358
    %360 = vmatprep.mubr.f32.mxu0 0.0
    %361 = vmatmul.mubr.f32.gmra.mrb[0].mxu0 %v163
    %v362 = vpop.f32.mrb[0].mxu0
    %v363 = vadd.f32 %v144, %v362
    %v364 = vpop.f32.mrb[0].mxu0
    %v365 = vadd.f32 %v144, %v364
    %366 = vdwg.mxu0
    %367 = vmatprep.subr.mxu0 %v61
    %368 = vmatpush1.msra.mxu0 %v60
    %369 = vmatprep.subr.mxu0 %v69
    %370 = vmatpush1.msra.mxu0 %v68
    %371 = vmatprep.subr.mxu0 %v77
    %372 = vmatpush1.msra.mxu0 %v76
    %373 = vmatprep.subr.mxu0 %v85
    %374 = vmatpush1.msra.mxu0 %v84
    %375 = vmatprep.subr.mxu0 %v93
    %376 = vmatpush1.msra.mxu0 %v92
    %377 = vmatprep.subr.mxu0 %v101
    %378 = vmatpush1.msra.mxu0 %v100
    %379 = vmatprep.subr.mxu0 0.0
    %380 = vmatpush1.msra.mxu0 0.0
    %381 = vmatprep.subr.mxu0 0.0
    %382 = vmatpush1.msra.mxu0 0.0
    %383 = vmatprep.subr.mxu0 0.0
    %384 = vmatpush1.msra.mxu0 0.0
    %385 = vmatprep.subr.mxu0 0.0
    %386 = vmatpush1.msra.mxu0 0.0
    %387 = vmatprep.subr.mxu0 0.0
    %388 = vmatpush1.msra.mxu0 0.0
    %389 = vmatprep.subr.mxu0 0.0
    %390 = vmatpush1.msra.mxu0 0.0
    %391 = vmatprep.subr.mxu0 0.0
    %392 = vmatpush1.msra.mxu0 0.0
    %393 = vmatprep.subr.mxu0 0.0
    %394 = vmatpush1.msra.mxu0 0.0
    %395 = vmatprep.subr.mxu0 0.0
    %396 = vmatpush1.msra.mxu0 0.0
    %397 = vmatprep.subr.mxu0 0.0
    %398 = vmatpush1.msra.mxu0 0.0
    %399 = vmatprep.subr.mxu0 0.0
    %400 = vmatpush1.msra.mxu0 0.0
    %401 = vmatprep.subr.mxu0 0.0
    %402 = vmatpush1.msra.mxu0 0.0
    %403 = vmatprep.subr.mxu0 0.0
    %404 = vmatpush1.msra.mxu0 0.0
    %405 = vmatprep.subr.mxu0 0.0
    %406 = vmatpush1.msra.mxu0 0.0
    %407 = vmatprep.subr.mxu0 0.0
    %408 = vmatpush1.msra.mxu0 0.0
    %409 = vmatprep.subr.mxu0 0.0
    %410 = vmatpush1.msra.mxu0 0.0
    %411 = vmatprep.subr.mxu0 0.0
    %412 = vmatpush1.msra.mxu0 0.0
    %413 = vmatprep.subr.mxu0 0.0
    %414 = vmatpush1.msra.mxu0 0.0
    %415 = vmatprep.subr.mxu0 0.0
    %416 = vmatpush1.msra.mxu0 0.0
    %417 = vmatprep.subr.mxu0 0.0
    %418 = vmatpush1.msra.mxu0 0.0
    %419 = vmatprep.subr.mxu0 0.0
    %420 = vmatpush1.msra.mxu0 0.0
    %421 = vmatprep.subr.mxu0 0.0
    %422 = vmatpush1.msra.mxu0 0.0
    %423 = vmatprep.subr.mxu0 0.0
    %424 = vmatpush1.msra.mxu0 0.0
    %425 = vmatprep.subr.mxu0 0.0
    %426 = vmatpush1.msra.mxu0 0.0
    %427 = vmatprep.subr.mxu0 0.0
    %428 = vmatpush1.msra.mxu0 0.0
    %429 = vmatprep.subr.mxu0 0.0
    %430 = vmatpush1.msra.mxu0 0.0
    %431 = vmatprep.mubr.f32.mxu0 0.0
    %432 = vmatmul.mubr.f32.gmra.mrb[0].mxu0 %v148
    %v433 = vpop.f32.mrb[0].mxu0
    %v434 = vadd.f32 %v119, %v433
    %v435 = vpop.f32.mrb[0].mxu0
    %v436 = vadd.f32 %v119, %v435
    %437 = vmatprep.mubr.f32.mxu0 0.0
    %438 = vmatmul.mubr.f32.gmra.mrb[0].mxu0 %v151
    %v439 = vpop.f32.mrb[0].mxu0
    %v440 = vadd.f32 %v124, %v439
    %v441 = vpop.f32.mrb[0].mxu0
    %v442 = vadd.f32 %v124, %v441
    %443 = vmatprep.mubr.f32.mxu0 0.0
    %444 = vmatmul.mubr.f32.gmra.mrb[0].mxu0 %v154
    %v445 = vpop.f32.mrb[0].mxu0
    %v446 = vadd.f32 %v129, %v445
    %v447 = vpop.f32.mrb[0].mxu0
    %v448 = vadd.f32 %v129, %v447
    %449 = vmatprep.mubr.f32.mxu0 0.0
    %450 = vmatmul.mubr.f32.gmra.mrb[0].mxu0 %v157
    %v451 = vpop.f32.mrb[0].mxu0
    %v452 = vadd.f32 %v134, %v451
    %v453 = vpop.f32.mrb[0].mxu0
    %v454 = vadd.f32 %v134, %v453
    %455 = vmatprep.mubr.f32.mxu0 0.0
    %456 = vmatmul.mubr.f32.gmra.mrb[0].mxu0 %v160
    %v457 = vpop.f32.mrb[0].mxu0
    %v458 = vadd.f32 %v139, %v457
    %v459 = vpop.f32.mrb[0].mxu0
    %v460 = vadd.f32 %v139, %v459
    %461 = vmatprep.mubr.f32.mxu0 0.0
    %462 = vmatmul.mubr.f32.gmra.mrb[0].mxu0 %v163
    %v463 = vpop.f32.mrb[0].mxu0
    %v464 = vadd.f32 %v144, %v463
    %v465 = vpop.f32.mrb[0].mxu0
    %v466 = vadd.f32 %v144, %v465
    %467 = vdwg.mxu0
    %468 = vmatprep.subr.mxu0 %v63
    %469 = vmatpush1.msra.mxu0 %v62
    %470 = vmatprep.subr.mxu0 %v71
    %471 = vmatpush1.msra.mxu0 %v70
    %472 = vmatprep.subr.mxu0 %v79
    %473 = vmatpush1.msra.mxu0 %v78
    %474 = vmatprep.subr.mxu0 %v87
    %475 = vmatpush1.msra.mxu0 %v86
    %476 = vmatprep.subr.mxu0 %v95
    %477 = vmatpush1.msra.mxu0 %v94
    %478 = vmatprep.subr.mxu0 %v103
    %479 = vmatpush1.msra.mxu0 %v102
    %480 = vmatprep.subr.mxu0 0.0
    %481 = vmatpush1.msra.mxu0 0.0
    %482 = vmatprep.subr.mxu0 0.0
    %483 = vmatpush1.msra.mxu0 0.0
    %484 = vmatprep.subr.mxu0 0.0
    %485 = vmatpush1.msra.mxu0 0.0
    %486 = vmatprep.subr.mxu0 0.0
    %487 = vmatpush1.msra.mxu0 0.0
    %488 = vmatprep.subr.mxu0 0.0
    %489 = vmatpush1.msra.mxu0 0.0
    %490 = vmatprep.subr.mxu0 0.0
    %491 = vmatpush1.msra.mxu0 0.0
    %492 = vmatprep.subr.mxu0 0.0
    %493 = vmatpush1.msra.mxu0 0.0
    %494 = vmatprep.subr.mxu0 0.0
    %495 = vmatpush1.msra.mxu0 0.0
    %496 = vmatprep.subr.mxu0 0.0
    %497 = vmatpush1.msra.mxu0 0.0
    %498 = vmatprep.subr.mxu0 0.0
    %499 = vmatpush1.msra.mxu0 0.0
    %500 = vmatprep.subr.mxu0 0.0
    %501 = vmatpush1.msra.mxu0 0.0
    %502 = vmatprep.subr.mxu0 0.0
    %503 = vmatpush1.msra.mxu0 0.0
    %504 = vmatprep.subr.mxu0 0.0
    %505 = vmatpush1.msra.mxu0 0.0
    %506 = vmatprep.subr.mxu0 0.0
    %507 = vmatpush1.msra.mxu0 0.0
    %508 = vmatprep.subr.mxu0 0.0
    %509 = vmatpush1.msra.mxu0 0.0
    %510 = vmatprep.subr.mxu0 0.0
    %511 = vmatpush1.msra.mxu0 0.0
    %512 = vmatprep.subr.mxu0 0.0
    %513 = vmatpush1.msra.mxu0 0.0
    %514 = vmatprep.subr.mxu0 0.0
    %515 = vmatpush1.msra.mxu0 0.0
    %516 = vmatprep.subr.mxu0 0.0
    %517 = vmatpush1.msra.mxu0 0.0
    %518 = vmatprep.subr.mxu0 0.0
    %519 = vmatpush1.msra.mxu0 0.0
    %520 = vmatprep.subr.mxu0 0.0
    %521 = vmatpush1.msra.mxu0 0.0
    %522 = vmatprep.subr.mxu0 0.0
    %523 = vmatpush1.msra.mxu0 0.0
    %524 = vmatprep.subr.mxu0 0.0
    %525 = vmatpush1.msra.mxu0 0.0
    %526 = vmatprep.subr.mxu0 0.0
    %527 = vmatpush1.msra.mxu0 0.0
    %528 = vmatprep.subr.mxu0 0.0
    %529 = vmatpush1.msra.mxu0 0.0
    %530 = vmatprep.subr.mxu0 0.0
    %531 = vmatpush1.msra.mxu0 0.0
    %532 = vmatprep.mubr.f32.mxu0 0.0
    %533 = vmatmul.mubr.f32.gmra.mrb[0].mxu0 %v148
    %v534 = vpop.f32.mrb[0].mxu0
    %v535 = vadd.f32 %v119, %v534
    %v536 = vpop.f32.mrb[0].mxu0
    %v537 = vadd.f32 %v119, %v536
    %538 = vmatprep.mubr.f32.mxu0 0.0
    %539 = vmatmul.mubr.f32.gmra.mrb[0].mxu0 %v151
    %v540 = vpop.f32.mrb[0].mxu0
    %v541 = vadd.f32 %v124, %v540
    %v542 = vpop.f32.mrb[0].mxu0
    %v543 = vadd.f32 %v124, %v542
    %544 = vmatprep.mubr.f32.mxu0 0.0
    %545 = vmatmul.mubr.f32.gmra.mrb[0].mxu0 %v154
    %v546 = vpop.f32.mrb[0].mxu0
    %v547 = vadd.f32 %v129, %v546
    %v548 = vpop.f32.mrb[0].mxu0
    %v549 = vadd.f32 %v129, %v548
    %550 = vmatprep.mubr.f32.mxu0 0.0
    %551 = vmatmul.mubr.f32.gmra.mrb[0].mxu0 %v157
    %v552 = vpop.f32.mrb[0].mxu0
    %v553 = vadd.f32 %v134, %v552
    %v554 = vpop.f32.mrb[0].mxu0
    %v555 = vadd.f32 %v134, %v554
    %556 = vmatprep.mubr.f32.mxu0 0.0
    %557 = vmatmul.mubr.f32.gmra.mrb[0].mxu0 %v160
    %v558 = vpop.f32.mrb[0].mxu0
    %v559 = vadd.f32 %v139, %v558
    %v560 = vpop.f32.mrb[0].mxu0
    %v561 = vadd.f32 %v139, %v560
    %562 = vmatprep.mubr.f32.mxu0 0.0
    %563 = vmatmul.mubr.f32.gmra.mrb[0].mxu0 %v163
    %v564 = vpop.f32.mrb[0].mxu0
    %v565 = vadd.f32 %v144, %v564
    %v566 = vpop.f32.mrb[0].mxu0
    %v567 = vadd.f32 %v144, %v566
    %568 = vdwg.mxu0
    %v569 = vadd.f32 %v232, 0.0
    %v570 = vadd.f32 %v234, 0.0
    %v571 = vadd.f32 %v333, 0.0
    %v572 = vadd.f32 %v335, 0.0
    %v573 = vadd.f32 %v434, 0.0
    %v574 = vadd.f32 %v436, 0.0
    %v575 = vadd.f32 %v535, 0.0
    %v576 = vadd.f32 %v537, 0.0
    %v577 = vadd.f32 %v238, 0.0
    %v578 = vadd.f32 %v240, 0.0
    %v579 = vadd.f32 %v339, 0.0
    %v580 = vadd.f32 %v341, 0.0
    %v581 = vadd.f32 %v440, 0.0
    %v582 = vadd.f32 %v442, 0.0
    %v583 = vadd.f32 %v541, 0.0
    %v584 = vadd.f32 %v543, 0.0
    %v585 = vmul.f32 %v232, %v232
    %v586 = vmul.f32 %v234, %v234
    %v587 = vmul.f32 %v333, %v333
    %v588 = vmul.f32 %v335, %v335
    %v589 = vmul.f32 %v434, %v434
    %v590 = vmul.f32 %v436, %v436
    %v591 = vmul.f32 %v535, %v535
    %v592 = vmul.f32 %v537, %v537
    %v593 = vmul.f32 %v238, %v238
    %v594 = vmul.f32 %v240, %v240
    %v595 = vmul.f32 %v339, %v339
    %v596 = vmul.f32 %v341, %v341
    %v597 = vmul.f32 %v440, %v440
    %v598 = vmul.f32 %v442, %v442
    %v599 = vmul.f32 %v541, %v541
    %v600 = vmul.f32 %v543, %v543
    %v601 = vadd.f32 %v585, %v593
    %v602 = vrot.slane %v601, 4
    %v603 = vadd.f32 %v601, %v602
    %v604 = vrot.slane %v603, 2
    %v605 = vadd.f32 %v603, %v604
    %v606 = vrot.slane %v605, 1
    %v607 = vadd.f32 %v605, %v606
    %v608 = vadd.f32 %v586, %v594
    %v609 = vrot.slane %v608, 4
    %v610 = vadd.f32 %v608, %v609
    %v611 = vrot.slane %v610, 2
    %v612 = vadd.f32 %v610, %v611
    %v613 = vrot.slane %v612, 1
    %v614 = vadd.f32 %v612, %v613
    %v615 = vadd.f32 %v587, %v595
    %v616 = vrot.slane %v615, 4
    %v617 = vadd.f32 %v615, %v616
    %v618 = vrot.slane %v617, 2
    %v619 = vadd.f32 %v617, %v618
    %v620 = vrot.slane %v619, 1
    %v621 = vadd.f32 %v619, %v620
    %v622 = vadd.f32 %v588, %v596
    %v623 = vrot.slane %v622, 4
    %v624 = vadd.f32 %v622, %v623
    %v625 = vrot.slane %v624, 2
    %v626 = vadd.f32 %v624, %v625
    %v627 = vrot.slane %v626, 1
    %v628 = vadd.f32 %v626, %v627
    %v629 = vadd.f32 %v589, %v597
    %v630 = vrot.slane %v629, 4
    %v631 = vadd.f32 %v629, %v630
    %v632 = vrot.slane %v631, 2
    %v633 = vadd.f32 %v631, %v632
    %v634 = vrot.slane %v633, 1
    %v635 = vadd.f32 %v633, %v634
    %v636 = vadd.f32 %v590, %v598
    %v637 = vrot.slane %v636, 4
    %v638 = vadd.f32 %v636, %v637
    %v639 = vrot.slane %v638, 2
    %v640 = vadd.f32 %v638, %v639
    %v641 = vrot.slane %v640, 1
    %v642 = vadd.f32 %v640, %v641
    %v643 = vadd.f32 %v591, %v599
    %v644 = vrot.slane %v643, 4
    %v645 = vadd.f32 %v643, %v644
    %v646 = vrot.slane %v645, 2
    %v647 = vadd.f32 %v645, %v646
    %v648 = vrot.slane %v647, 1
    %v649 = vadd.f32 %v647, %v648
    %v650 = vadd.f32 %v592, %v600
    %v651 = vrot.slane %v650, 4
    %v652 = vadd.f32 %v650, %v651
    %v653 = vrot.slane %v652, 2
    %v654 = vadd.f32 %v652, %v653
    %v655 = vrot.slane %v654, 1
    %v656 = vadd.f32 %v654, %v655
    %v657 = vadd.f32 %v607, 0.0
    %v658 = vadd.f32 %v614, 0.0
    %v659 = vadd.f32 %v621, 0.0
    %v660 = vadd.f32 %v628, 0.0
    %v661 = vadd.f32 %v635, 0.0
    %v662 = vadd.f32 %v642, 0.0
    %v663 = vadd.f32 %v649, 0.0
    %v664 = vadd.f32 %v656, 0.0
    %v665 = vadd.f32 %v569, %v244
    %v666 = vadd.f32 %v570, %v246
    %v667 = vadd.f32 %v571, %v345
    %v668 = vadd.f32 %v572, %v347
    %v669 = vadd.f32 %v573, %v446
    %v670 = vadd.f32 %v574, %v448
    %v671 = vadd.f32 %v575, %v547
    %v672 = vadd.f32 %v576, %v549
    %v673 = vadd.f32 %v577, %v250
    %v674 = vadd.f32 %v578, %v252
    %v675 = vadd.f32 %v579, %v351
    %v676 = vadd.f32 %v580, %v353
    %v677 = vadd.f32 %v581, %v452
    %v678 = vadd.f32 %v582, %v454
    %v679 = vadd.f32 %v583, %v553
    %v680 = vadd.f32 %v584, %v555
    %v681 = vmul.f32 %v244, %v244
    %v682 = vmul.f32 %v246, %v246
    %v683 = vmul.f32 %v345, %v345
    %v684 = vmul.f32 %v347, %v347
    %v685 = vmul.f32 %v446, %v446
    %v686 = vmul.f32 %v448, %v448
    %v687 = vmul.f32 %v547, %v547
    %v688 = vmul.f32 %v549, %v549
    %v689 = vmul.f32 %v250, %v250
    %v690 = vmul.f32 %v252, %v252
    %v691 = vmul.f32 %v351, %v351
    %v692 = vmul.f32 %v353, %v353
    %v693 = vmul.f32 %v452, %v452
    %v694 = vmul.f32 %v454, %v454
    %v695 = vmul.f32 %v553, %v553
    %v696 = vmul.f32 %v555, %v555
    %v697 = vadd.f32 %v681, %v689
    %v698 = vrot.slane %v697, 4
    %v699 = vadd.f32 %v697, %v698
    %v700 = vrot.slane %v699, 2
    %v701 = vadd.f32 %v699, %v700
    %v702 = vrot.slane %v701, 1
    %v703 = vadd.f32 %v701, %v702
    %v704 = vadd.f32 %v682, %v690
    %v705 = vrot.slane %v704, 4
    %v706 = vadd.f32 %v704, %v705
    %v707 = vrot.slane %v706, 2
    %v708 = vadd.f32 %v706, %v707
    %v709 = vrot.slane %v708, 1
    %v710 = vadd.f32 %v708, %v709
    %v711 = vadd.f32 %v683, %v691
    %v712 = vrot.slane %v711, 4
    %v713 = vadd.f32 %v711, %v712
    %v714 = vrot.slane %v713, 2
    %v715 = vadd.f32 %v713, %v714
    %v716 = vrot.slane %v715, 1
    %v717 = vadd.f32 %v715, %v716
    %v718 = vadd.f32 %v684, %v692
    %v719 = vrot.slane %v718, 4
    %v720 = vadd.f32 %v718, %v719
    %v721 = vrot.slane %v720, 2
    %v722 = vadd.f32 %v720, %v721
    %v723 = vrot.slane %v722, 1
    %v724 = vadd.f32 %v722, %v723
    %v725 = vadd.f32 %v685, %v693
    %v726 = vrot.slane %v725, 4
    %v727 = vadd.f32 %v725, %v726
    %v728 = vrot.slane %v727, 2
    %v729 = vadd.f32 %v727, %v728
    %v730 = vrot.slane %v729, 1
    %v731 = vadd.f32 %v729, %v730
    %v732 = vadd.f32 %v686, %v694
    %v733 = vrot.slane %v732, 4
    %v734 = vadd.f32 %v732, %v733
    %v735 = vrot.slane %v734, 2
    %v736 = vadd.f32 %v734, %v735
    %v737 = vrot.slane %v736, 1
    %v738 = vadd.f32 %v736, %v737
    %v739 = vadd.f32 %v687, %v695
    %v740 = vrot.slane %v739, 4
    %v741 = vadd.f32 %v739, %v740
    %v742 = vrot.slane %v741, 2
    %v743 = vadd.f32 %v741, %v742
    %v744 = vrot.slane %v743, 1
    %v745 = vadd.f32 %v743, %v744
    %v746 = vadd.f32 %v688, %v696
    %v747 = vrot.slane %v746, 4
    %v748 = vadd.f32 %v746, %v747
    %v749 = vrot.slane %v748, 2
    %v750 = vadd.f32 %v748, %v749
    %v751 = vrot.slane %v750, 1
    %v752 = vadd.f32 %v750, %v751
    %v753 = vadd.f32 %v657, %v703
    %v754 = vadd.f32 %v658, %v710
    %v755 = vadd.f32 %v659, %v717
    %v756 = vadd.f32 %v660, %v724
    %v757 = vadd.f32 %v661, %v731
    %v758 = vadd.f32 %v662, %v738
    %v759 = vadd.f32 %v663, %v745
    %v760 = vadd.f32 %v664, %v752
    %v761 = vadd.f32 %v665, %v256
    %v762 = vadd.f32 %v666, %v258
    %v763 = vadd.f32 %v667, %v357
    %v764 = vadd.f32 %v668, %v359
    %v765 = vadd.f32 %v669, %v458
    %v766 = vadd.f32 %v670, %v460
    %v767 = vadd.f32 %v671, %v559
    %v768 = vadd.f32 %v672, %v561
    %v769 = vadd.f32 %v673, %v262
    %v770 = vadd.f32 %v674, %v264
    %v771 = vadd.f32 %v675, %v363
    %v772 = vadd.f32 %v676, %v365
    %v773 = vadd.f32 %v677, %v464
    %v774 = vadd.f32 %v678, %v466
    %v775 = vadd.f32 %v679, %v565
    %v776 = vadd.f32 %v680, %v567
    %v777 = vmul.f32 %v256, %v256
    %v778 = vmul.f32 %v258, %v258
    %v779 = vmul.f32 %v357, %v357
    %v780 = vmul.f32 %v359, %v359
    %v781 = vmul.f32 %v458, %v458
    %v782 = vmul.f32 %v460, %v460
    %v783 = vmul.f32 %v559, %v559
    %v784 = vmul.f32 %v561, %v561
    %v785 = vmul.f32 %v262, %v262
    %v786 = vmul.f32 %v264, %v264
    %v787 = vmul.f32 %v363, %v363
    %v788 = vmul.f32 %v365, %v365
    %v789 = vmul.f32 %v464, %v464
    %v790 = vmul.f32 %v466, %v466
    %v791 = vmul.f32 %v565, %v565
    %v792 = vmul.f32 %v567, %v567
    %v793 = vadd.f32 %v777, %v785
    %v794 = vrot.slane %v793, 4
    %v795 = vadd.f32 %v793, %v794
    %v796 = vrot.slane %v795, 2
    %v797 = vadd.f32 %v795, %v796
    %v798 = vrot.slane %v797, 1
    %v799 = vadd.f32 %v797, %v798
    %v800 = vadd.f32 %v778, %v786
    %v801 = vrot.slane %v800, 4
    %v802 = vadd.f32 %v800, %v801
    %v803 = vrot.slane %v802, 2
    %v804 = vadd.f32 %v802, %v803
    %v805 = vrot.slane %v804, 1
    %v806 = vadd.f32 %v804, %v805
    %v807 = vadd.f32 %v779, %v787
    %v808 = vrot.slane %v807, 4
    %v809 = vadd.f32 %v807, %v808
    %v810 = vrot.slane %v809, 2
    %v811 = vadd.f32 %v809, %v810
    %v812 = vrot.slane %v811, 1
    %v813 = vadd.f32 %v811, %v812
    %v814 = vadd.f32 %v780, %v788
    %v815 = vrot.slane %v814, 4
    %v816 = vadd.f32 %v814, %v815
    %v817 = vrot.slane %v816, 2
    %v818 = vadd.f32 %v816, %v817
    %v819 = vrot.slane %v818, 1
    %v820 = vadd.f32 %v818, %v819
    %v821 = vadd.f32 %v781, %v789
    %v822 = vrot.slane %v821, 4
    %v823 = vadd.f32 %v821, %v822
    %v824 = vrot.slane %v823, 2
    %v825 = vadd.f32 %v823, %v824
    %v826 = vrot.slane %v825, 1
    %v827 = vadd.f32 %v825, %v826
    %v828 = vadd.f32 %v782, %v790
    %v829 = vrot.slane %v828, 4
    %v830 = vadd.f32 %v828, %v829
    %v831 = vrot.slane %v830, 2
    %v832 = vadd.f32 %v830, %v831
    %v833 = vrot.slane %v832, 1
    %v834 = vadd.f32 %v832, %v833
    %v835 = vadd.f32 %v783, %v791
    %v836 = vrot.slane %v835, 4
    %v837 = vadd.f32 %v835, %v836
    %v838 = vrot.slane %v837, 2
    %v839 = vadd.f32 %v837, %v838
    %v840 = vrot.slane %v839, 1
    %v841 = vadd.f32 %v839, %v840
    %v842 = vadd.f32 %v784, %v792
    %v843 = vrot.slane %v842, 4
    %v844 = vadd.f32 %v842, %v843
    %v845 = vrot.slane %v844, 2
    %v846 = vadd.f32 %v844, %v845
    %v847 = vrot.slane %v846, 1
    %v848 = vadd.f32 %v846, %v847
    %v849 = vadd.f32 %v753, %v799
    %v850 = vadd.f32 %v754, %v806
    %v851 = vadd.f32 %v755, %v813
    %v852 = vadd.f32 %v756, %v820
    %v853 = vadd.f32 %v757, %v827
    %v854 = vadd.f32 %v758, %v834
    %v855 = vadd.f32 %v759, %v841
    %v856 = vadd.f32 %v760, %v848
    %v857 = vmul.f32 %v761, %v761
    %v858 = vmul.f32 %v762, %v762
    %v859 = vmul.f32 %v763, %v763
    %v860 = vmul.f32 %v764, %v764
    %v861 = vmul.f32 %v765, %v765
    %v862 = vmul.f32 %v766, %v766
    %v863 = vmul.f32 %v767, %v767
    %v864 = vmul.f32 %v768, %v768
    %v865 = vmul.f32 %v769, %v769
    %v866 = vmul.f32 %v770, %v770
    %v867 = vmul.f32 %v771, %v771
    %v868 = vmul.f32 %v772, %v772
    %v869 = vmul.f32 %v773, %v773
    %v870 = vmul.f32 %v774, %v774
    %v871 = vmul.f32 %v775, %v775
    %v872 = vmul.f32 %v776, %v776
    %v873 = vadd.f32 %v857, %v865
    %v874 = vrot.slane %v873, 4
    %v875 = vadd.f32 %v873, %v874
    %v876 = vrot.slane %v875, 2
    %v877 = vadd.f32 %v875, %v876
    %v878 = vrot.slane %v877, 1
    %v879 = vadd.f32 %v877, %v878
    %v880 = vadd.f32 %v858, %v866
    %v881 = vrot.slane %v880, 4
    %v882 = vadd.f32 %v880, %v881
    %v883 = vrot.slane %v882, 2
    %v884 = vadd.f32 %v882, %v883
    %v885 = vrot.slane %v884, 1
    %v886 = vadd.f32 %v884, %v885
    %v887 = vadd.f32 %v859, %v867
    %v888 = vrot.slane %v887, 4
    %v889 = vadd.f32 %v887, %v888
    %v890 = vrot.slane %v889, 2
    %v891 = vadd.f32 %v889, %v890
    %v892 = vrot.slane %v891, 1
    %v893 = vadd.f32 %v891, %v892
    %v894 = vadd.f32 %v860, %v868
    %v895 = vrot.slane %v894, 4
    %v896 = vadd.f32 %v894, %v895
    %v897 = vrot.slane %v896, 2
    %v898 = vadd.f32 %v896, %v897
    %v899 = vrot.slane %v898, 1
    %v900 = vadd.f32 %v898, %v899
    %v901 = vadd.f32 %v861, %v869
    %v902 = vrot.slane %v901, 4
    %v903 = vadd.f32 %v901, %v902
    %v904 = vrot.slane %v903, 2
    %v905 = vadd.f32 %v903, %v904
    %v906 = vrot.slane %v905, 1
    %v907 = vadd.f32 %v905, %v906
    %v908 = vadd.f32 %v862, %v870
    %v909 = vrot.slane %v908, 4
    %v910 = vadd.f32 %v908, %v909
    %v911 = vrot.slane %v910, 2
    %v912 = vadd.f32 %v910, %v911
    %v913 = vrot.slane %v912, 1
    %v914 = vadd.f32 %v912, %v913
    %v915 = vadd.f32 %v863, %v871
    %v916 = vrot.slane %v915, 4
    %v917 = vadd.f32 %v915, %v916
    %v918 = vrot.slane %v917, 2
    %v919 = vadd.f32 %v917, %v918
    %v920 = vrot.slane %v919, 1
    %v921 = vadd.f32 %v919, %v920
    %v922 = vadd.f32 %v864, %v872
    %v923 = vrot.slane %v922, 4
    %v924 = vadd.f32 %v922, %v923
    %v925 = vrot.slane %v924, 2
    %v926 = vadd.f32 %v924, %v925
    %v927 = vrot.slane %v926, 1
    %v928 = vadd.f32 %v926, %v927
    %v929 = vsub.f32 %v879, %v849
    %v930 = vsub.f32 %v886, %v850
    %v931 = vsub.f32 %v893, %v851
    %v932 = vsub.f32 %v900, %v852
    %v933 = vsub.f32 %v907, %v853
    %v934 = vsub.f32 %v914, %v854
    %v935 = vsub.f32 %v921, %v855
    %v936 = vsub.f32 %v928, %v856
    %v937 = vmul.f32 %v929, 0.5
    %v938 = vmul.f32 %v930, 0.5
    %v939 = vmul.f32 %v931, 0.5
    %v940 = vmul.f32 %v932, 0.5
    %v941 = vmul.f32 %v933, 0.5
    %v942 = vmul.f32 %v934, 0.5
    %v943 = vmul.f32 %v935, 0.5
    %v944 = vmul.f32 %v936, 0.5
    %v945 = vld [vmem:[%s3] sm:$0xff]
    %v954 = vcombine.low %v937, %v938
    %v955 = vcombine.low %v939, %v940
    %v956 = vcombine.low %v941, %v942
    %v957 = vcombine.low %v943, %v944
    %v959 = vunpack.c.l.s4 1966171168
    %v960 = vunpack.c.0.s8 %v959
    %v961 = vlaneseq
    %v962 = vshrl.u32 %v961, 7
    %v963 = vsub.s32 %v960, %v962
    %v964 = vrot.slane %v954, %v963
    %v966 = vunpack.c.l.s4 1966171168
    %v967 = vunpack.c.0.s8 %v966
    %v968 = vlaneseq
    %v969 = vshrl.u32 %v968, 7
    %v970 = vsub.s32 %v967, %v969
    %v971 = vrot.slane %v955, %v970
    %v973 = vunpack.c.l.s4 1966171168
    %v974 = vunpack.c.0.s8 %v973
    %v975 = vlaneseq
    %v976 = vshrl.u32 %v975, 7
    %v977 = vsub.s32 %v974, %v976
    %v978 = vrot.slane %v956, %v977
    %v980 = vunpack.c.l.s4 1966171168
    %v981 = vunpack.c.0.s8 %v980
    %v982 = vlaneseq
    %v983 = vshrl.u32 %v982, 7
    %v984 = vsub.s32 %v981, %v983
    %v985 = vrot.slane %v957, %v984
    %v986 = vcombine.low %v964, %v971
    %v987 = vcombine.low %v978, %v985
    %v989 = vunpack.c.l.s4 1966171168
    %v990 = vunpack.c.0.s8 %v989
    %v991 = vlaneseq
    %v992 = vshrl.u32 %v991, 7
    %v993 = vsub.s32 %v990, %v992
    %v994 = vrot.slane %v986, %v993
    %v996 = vunpack.c.l.s4 1966171168
    %v997 = vunpack.c.0.s8 %v996
    %v998 = vlaneseq
    %v999 = vshrl.u32 %v998, 7
    %v1000 = vsub.s32 %v997, %v999
    %v1001 = vrot.slane %v987, %v1000
    %v1002 = vcombine.low %v994, %v1001
    %v1004 = vadd.f32 %v945, %v1002
    %v1005 = vxor.u32 %v1004, 2147483648
    %v1006 = vmul.f32 %v1005, 1.442695
    %v1007 = vpow.pop %v1006
    %v1008 = vadd.f32 %v1007, 1.0
    %v1009 = vrcp.pop %v1008
    %v1010 = vmul.f32 1.0, %v1009
    %1011 = vst [vmem:[#allocation5] sm:$0xff] %v1010
    // Predicated region
    $region22: #{tpu_custom_call.1} parent=1 // pred_check
      _
    $region23: #{tpu_custom_call.1} parent=1 // pred_check_branch
      %1013 = sbr.rel (0) target = $region25
    $region24: #{tpu_custom_call.1} parent=1 // pred_region
      %s1015 = ssub.s32 128, 128
      %1016 = vsyncadd [#allocation4], %s1015
      %s1018 = sshll.u32 [#allocation5], 4
      %s1019 = int_to_ptr.vmem [resolvable:$true] %s1018
      %1021 = dma.vmem_to_hbm [thread:$0]  %s1019, 128, %s4, [#allocation4]
    $region25: #{tpu_custom_call.1} parent=1 // pred_fallthru
      _
    // Predicated region
    $region26: #{tpu_custom_call.1} parent=1 // pred_check
      _
    $region27: #{tpu_custom_call.1} parent=1 // pred_check_branch
      %1023 = sbr.rel (0) target = $region29
    $region28: #{tpu_custom_call.1} parent=1 // pred_region
      %1024 = dma.done [#allocation4], 128
    $region29: #{tpu_custom_call.1} parent=1 // pred_fallthru
      _
    %1025 = vsyncpa [#allocation3], 1
    %1026 = vsyncpa [#allocation4], 1

</llo_original>
